<compile_context>
chip_gen: v7x
topology: tpu7x:2x2x1
jax: 0.10.0
libtpu: 0.0.40
codegen_flags: <defaults>
</compile_context>

<pallas_src>
import functools

import jax
import jax.numpy as jnp
from jax.experimental import pallas as pl
from jax.experimental.pallas import tpu as pltpu


def gcn_kernel(gt_ref, h_ref, w_ref, b_ref, o_ref, *, agg_dtype):
    """One graph per grid step.

    gt_ref : (1, N, N)       g^T (adjacency, pre-transposed in the wrapper)
    h_ref  : (1, N, IN)      node features
    w_ref  : (IN, OUT_PAD)   GCNConv.lin weight, zero-padded to a multiple of 128 lanes
    b_ref  : (1, OUT_PAD)    GCNConv bias, zero-padded
    o_ref  : (1, N, OUT_PAD) lane-dense output block
    """
    f32 = jnp.float32
    n = gt_ref.shape[-1]

    gt = gt_ref[0]  # (N, N) = g^T for this graph
    # A_hat^T[c, r] = (g[r, c] != 0) or (c == r): dense_to_sparse gives unit edge
    # weights; add_remaining_self_loops forces the diagonal to 1. One compare + or.
    # (In a tiled large-N version this would be gated with pl.when on diagonal blocks.)
    diag = (jax.lax.broadcasted_iota(jnp.int32, (n, n), 0)
            == jax.lax.broadcasted_iota(jnp.int32, (n, n), 1))
    a_hat_t = jnp.logical_or(gt != 0, diag).astype(f32)            # (N, N), 0/1

    # deg[c] = column sum of A_hat = lane (XLU) reduction of A_hat^T -> (N, 1).
    # Self loops guarantee deg >= 1, so rsqrt needs no zero guard.
    deg = jnp.sum(a_hat_t, axis=1, keepdims=True)
    d_inv_sqrt = jax.lax.rsqrt(deg)                                # (N, 1), f32

    # Feature transform (GCNConv.lin, no bias): f32 MXU matmul.
    xw = jnp.dot(h_ref[0].astype(f32), w_ref[...],
                 preferred_element_type=f32)                       # (N, OUT_PAD)

    # message[r] = d[r] * xw[r]; aggregate at target as a plain matmul:
    # agg[c] = sum_r A_hat^T[c, r] * msg[r]. MXU operands in bf16 (adjacency 0/1 is
    # exact in bf16), accumulation in f32. Normalization stays f32 on the VPU.
    msg = (d_inv_sqrt * xw).astype(agg_dtype)
    agg = jnp.dot(a_hat_t.astype(agg_dtype), msg,
                  preferred_element_type=f32)                      # (N, OUT_PAD) f32

    out = d_inv_sqrt * agg + b_ref[...]
    o_ref[0] = jnp.maximum(out, 0.0)                               # lane-dense store


def gcn_forward_batched(g, h, w, b, *, agg_dtype=jnp.bfloat16):
    """Batched GCNConv + ReLU: g (B,N,N), h (B,N,in_dim) -> (B,N,out_dim)."""
    B, N, _ = g.shape
    in_dim, out_dim = w.shape
    out_pad = pl.cdiv(out_dim, 128) * 128   # lane-dense output / full MXU N-width

    # Zero-pad the projection and bias so the kernel's last dim is a multiple of 128.
    w_p = jnp.zeros((in_dim, out_pad), jnp.float32).at[:, :out_dim].set(
        w.astype(jnp.float32))
    b_p = jnp.zeros((1, out_pad), jnp.float32).at[:, :out_dim].set(
        b.astype(jnp.float32).reshape(1, out_dim))

    # Pre-transpose the adjacency once (wrapper-side layout plumbing) so the in-kernel
    # aggregation is a standard matmul rather than a dim-0 (transposed) contraction.
    g_t = jnp.swapaxes(g, -1, -2)

    kernel = functools.partial(gcn_kernel, agg_dtype=agg_dtype)
    out = pl.pallas_call(
        kernel,
        out_shape=jax.ShapeDtypeStruct((B, N, out_pad), jnp.float32),
        grid=(B,),
        in_specs=[
            pl.BlockSpec((1, N, N), lambda i: (i, 0, 0)),         # g^T, per graph
            pl.BlockSpec((1, N, in_dim), lambda i: (i, 0, 0)),    # h,   per graph
            pl.BlockSpec((in_dim, out_pad), lambda i: (0, 0)),    # W (resident)
            pl.BlockSpec((1, out_pad), lambda i: (0, 0)),         # bias (resident)
        ],
        out_specs=pl.BlockSpec((1, N, out_pad), lambda i: (i, 0, 0)),
        compiler_params=pltpu.CompilerParams(
            dimension_semantics=("parallel",)),   # independent graphs -> TC sharding on v7x
    )(g_t, h, w_p, b_p)
    return out[:, :, :out_dim]


def gcn_forward(g, h, w, b, **kwargs):
    """Single-graph entry point matching GCN.forward(g, h)."""
    return gcn_forward_batched(g[None], h[None], w, b, **kwargs)[0]


def gcn_ref(g, h, w, b):
    """Pure-JAX f32 reference mirroring PyG GCNConv(normalize, add_self_loops, bias) + ReLU."""
    n = g.shape[0]
    adj = (g != 0).astype(jnp.float32)
    a_hat = jnp.where(jnp.eye(n, dtype=bool), 1.0, adj)
    deg = a_hat.sum(axis=0)                        # aggregation at target -> column sums
    d = deg ** -0.5
    xw = jnp.dot(h.astype(jnp.float32), w, precision=jax.lax.Precision.HIGHEST)
    norm_adj = a_hat * d[:, None] * d[None, :]
    out = jnp.dot(norm_adj.T, xw, precision=jax.lax.Precision.HIGHEST) + b[None, :]
    return jnp.maximum(out, 0.0)


if __name__ == "__main__":
    # Small shapes: B=4 graphs, N=8 nodes, in_dim=16, out_dim=32, p=0.0 (Dropout -> Identity)
    B, N, IN_DIM, OUT_DIM = 4, 8, 16, 32
    key = jax.random.PRNGKey(0)
    kg, kh, kw, kb = jax.random.split(key, 4)

    # dense 0/1 adjacencies, no self loops in the input graphs (the kernel adds them)
    g = (jax.random.uniform(kg, (B, N, N)) > 0.6).astype(jnp.float32)
    g = g * (1.0 - jnp.eye(N, dtype=jnp.float32))
    h = jax.random.normal(kh, (B, N, IN_DIM), dtype=jnp.float32)

    # GCNConv params: glorot-uniform weight (in_dim, out_dim), small random bias
    limit = (6.0 / (IN_DIM + OUT_DIM)) ** 0.5
    w = jax.random.uniform(kw, (IN_DIM, OUT_DIM), minval=-limit, maxval=limit,
                           dtype=jnp.float32)
    b = 0.1 * jax.random.normal(kb, (OUT_DIM,), dtype=jnp.float32)

    ref = jax.vmap(gcn_ref, in_axes=(0, 0, None, None))(g, h, w, b)

    # Exact-semantics path (f32 aggregation) — tight check against the PyG reference.
    out_f32 = gcn_forward_batched(g, h, w, b, agg_dtype=jnp.float32)
    jax.block_until_ready(out_f32)
    assert out_f32.shape == (B, N, OUT_DIM)
    assert jnp.allclose(out_f32, ref, rtol=1e-4, atol=1e-4), "f32 kernel mismatch"

    # Optimized default path: bf16 MXU operands for the adjacency aggregation with f32
    # accumulation (adjacency 0/1 exact; only the messages are rounded to bf16).
    out = gcn_forward_batched(g, h, w, b)
    jax.block_until_ready(out)
    assert out.shape == (B, N, OUT_DIM)
    assert jnp.allclose(out, ref, rtol=5e-2, atol=5e-2), "bf16-agg kernel mismatch"

    print("KERNEL_OK")
</pallas_src>

<mosaic_0001>
module attributes {stable_mosaic.version = 11 : i64} {
  func.func @gcn_kernel(%arg0: i32, %arg1: memref<1x8x8xf32, #tpu.memory_space<vmem>>, %arg2: memref<1x8x16xf32, #tpu.memory_space<vmem>>, %arg3: memref<16x128xf32, #tpu.memory_space<vmem>>, %arg4: memref<1x128xf32, #tpu.memory_space<vmem>>, %arg5: memref<1x8x128xf32, #tpu.memory_space<vmem>>) attributes {dimension_semantics = [#tpu.dimension_semantics<parallel>], iteration_bounds = array<i64: 4>, scalar_prefetch = 0 : i64, scratch_operands = 0 : i64, tpu.core_type = #tpu.core_type<tc>, window_params = [{transform_indices = @transform_0, window_bounds = array<i64: 1, 8, 8>}, {transform_indices = @transform_1, window_bounds = array<i64: 1, 8, 16>}, {pipeline_mode = #tpu.pipeline_mode<synchronous>, transform_indices = @transform_2, window_bounds = array<i64: 16, 128>}, {pipeline_mode = #tpu.pipeline_mode<synchronous>, transform_indices = @transform_3, window_bounds = array<i64: 1, 128>}, {transform_indices = @transform_4, window_bounds = array<i64: 1, 8, 128>}]} {
    %c0 = arith.constant 0 : index
    %c0_0 = arith.constant 0 : index
    %c0_1 = arith.constant 0 : index
    %0 = vector.load %arg1[%c0, %c0_0, %c0_1] : memref<1x8x8xf32, #tpu.memory_space<vmem>>, vector<1x8x8xf32>
    %1 = vector.shape_cast %0 : vector<1x8x8xf32> to vector<8x8xf32>
    %2 = tpu.iota {dimensions = array<i32: 0>} : vector<8x8xi32>
    %3 = tpu.iota {dimensions = array<i32: 1>} : vector<8x8xi32>
    %4 = arith.cmpi eq, %2, %3 : vector<8x8xi32>
    %cst = arith.constant 0.000000e+00 : f32
    %5 = vector.broadcast %cst : f32 to vector<8x8xf32>
    %6 = arith.cmpf one, %1, %5 : vector<8x8xf32>
    %7 = arith.ori %6, %4 : vector<8x8xi1>
    %8 = arith.extui %7 : vector<8x8xi1> to vector<8x8xi32>
    %9 = arith.sitofp %8 : vector<8x8xi32> to vector<8x8xf32>
    %cst_2 = arith.constant dense<0.000000e+00> : vector<8xf32>
    %10 = vector.multi_reduction <add>, %9, %cst_2 [1] : vector<8x8xf32> to vector<8xf32>
    %11 = vector.shape_cast %10 : vector<8xf32> to vector<8x1xf32>
    %12 = math.rsqrt %11 : vector<8x1xf32>
    %c0_3 = arith.constant 0 : index
    %c0_4 = arith.constant 0 : index
    %c0_5 = arith.constant 0 : index
    %13 = vector.load %arg2[%c0_3, %c0_4, %c0_5] : memref<1x8x16xf32, #tpu.memory_space<vmem>>, vector<1x8x16xf32>
    %14 = vector.shape_cast %13 : vector<1x8x16xf32> to vector<8x16xf32>
    %c0_6 = arith.constant 0 : index
    %c0_7 = arith.constant 0 : index
    %15 = vector.load %arg3[%c0_6, %c0_7] : memref<16x128xf32, #tpu.memory_space<vmem>>, vector<16x128xf32>
    %cst_8 = arith.constant dense<0.000000e+00> : vector<8x128xf32>
    %16 = tpu.matmul %14, %15, %cst_8 {dimension_numbers = #tpu.dot_dimension_numbers<[1], [0], [0], [1], [0, 0, 1, 1], [], []>} : vector<8x16xf32>, vector<16x128xf32>, vector<8x128xf32> -> vector<8x128xf32>
    %17 = vector.broadcast %12 : vector<8x1xf32> to vector<8x128xf32>
    %18 = arith.mulf %17, %16 : vector<8x128xf32>
    %cst_9 = arith.constant dense<0.000000e+00> : vector<8x128xf32>
    %19 = tpu.matmul %9, %18, %cst_9 {dimension_numbers = #tpu.dot_dimension_numbers<[1], [0], [0], [1], [0, 0, 1, 1], [], []>} : vector<8x8xf32>, vector<8x128xf32>, vector<8x128xf32> -> vector<8x128xf32>
    %20 = vector.broadcast %12 : vector<8x1xf32> to vector<8x128xf32>
    %21 = arith.mulf %20, %19 : vector<8x128xf32>
    %c0_10 = arith.constant 0 : index
    %c0_11 = arith.constant 0 : index
    %22 = vector.load %arg4[%c0_10, %c0_11] : memref<1x128xf32, #tpu.memory_space<vmem>>, vector<1x128xf32>
    %23 = vector.broadcast %22 : vector<1x128xf32> to vector<8x128xf32>
    %24 = arith.addf %21, %23 : vector<8x128xf32>
    %cst_12 = arith.constant 0.000000e+00 : f32
    %25 = vector.broadcast %cst_12 : f32 to vector<8x128xf32>
    %26 = arith.maximumf %24, %25 : vector<8x128xf32>
    %c0_13 = arith.constant 0 : index
    %c0_14 = arith.constant 0 : index
    %c0_15 = arith.constant 0 : index
    %27 = vector.load %arg5[%c0_13, %c0_14, %c0_15] : memref<1x8x128xf32, #tpu.memory_space<vmem>>, vector<1x8x128xf32>
    %28 = vector.shape_cast %27 : vector<1x8x128xf32> to vector<8x128xf32>
    %29 = vector.shape_cast %26 : vector<8x128xf32> to vector<1x8x128xf32>
    tpu.vector_store %arg5[%c0_13, %c0_14, %c0_15], %29 {strides = array<i32>} : memref<1x8x128xf32, #tpu.memory_space<vmem>>, vector<1x8x128xf32>,
    return
  }
  func.func @transform_0(%arg0: i32) -> (i32, i32, i32) {
    %c0_i32 = arith.constant 0 : i32
    %c0_i32_0 = arith.constant 0 : i32
    %c0_i32_1 = arith.constant 0 : i32
    return %arg0, %c0_i32, %c0_i32_0 : i32, i32, i32
  }
  func.func @transform_1(%arg0: i32) -> (i32, i32, i32) {
    %c0_i32 = arith.constant 0 : i32
    %c0_i32_0 = arith.constant 0 : i32
    %c0_i32_1 = arith.constant 0 : i32
    return %arg0, %c0_i32, %c0_i32_0 : i32, i32, i32
  }
  func.func @transform_2(%arg0: i32) -> (i32, i32) {
    %c0_i32 = arith.constant 0 : i32
    %c0_i32_0 = arith.constant 0 : i32
    %c0_i32_1 = arith.constant 0 : i32
    return %c0_i32, %c0_i32_0 : i32, i32
  }
  func.func @transform_3(%arg0: i32) -> (i32, i32) {
    %c0_i32 = arith.constant 0 : i32
    %c0_i32_0 = arith.constant 0 : i32
    %c0_i32_1 = arith.constant 0 : i32
    return %c0_i32, %c0_i32_0 : i32, i32
  }
  func.func @transform_4(%arg0: i32) -> (i32, i32, i32) {
    %c0_i32 = arith.constant 0 : i32
    %c0_i32_0 = arith.constant 0 : i32
    %c0_i32_1 = arith.constant 0 : i32
    return %arg0, %c0_i32, %c0_i32_0 : i32, i32, i32
  }
}

</mosaic_0001>

<llo_original>
// kernel: tpu_custom_call.1
$region0: #{tpu_custom_call.1}
  #allocation0 [shape = 'u32[]', space=smem, size = 0x4, offset = 0x4, fixed_abs, tag = 'smem constant byte address 0x4 - core index']
  #allocation1 [shape = 'u32[144,128]{1,0:T(1,128)}', space=vmem, size = 0x12000, scoped, tag = 'internal scratch']
  %s0 = inlined_call_operand.hbm [shape: f32[4,8,8], index: 0, kind: input, shape index: {}]
  %s1 = inlined_call_operand.hbm [shape: f32[4,8,16], index: 1, kind: input, shape index: {}]
  %s2 = inlined_call_operand.hbm [shape: f32[16,128], index: 2, kind: input, shape index: {}]
  %s3 = inlined_call_operand.vmem [shape: f32[1,128], index: 3, kind: input, shape index: {}]
  %s4 = inlined_call_operand.hbm [shape: f32[4,8,128], index: 4, kind: output, shape index: {}]
  %s5 = sld [smem:[#allocation0]]
  $region61: #{tpu_custom_call.1} parent=0
    _
  %s7 = ssub.s32 1, %s5
  %s8 = scalar_select 0, %s7, %s5
  $region1: #{tpu_custom_call.1} parent=0
    #allocation2 [shape = 'u8[8192]{0}', space=vmem, size = 0x2000, scoped, tag = 'input window, operand 0']
    #allocation3 [shape = 's32[2]{0}', space=sflag, size = 0x8, scoped, tag = 'scoped memory for tpu_custom_call.1']
    #allocation4 [shape = 's32[2]{0}', space=sflag, size = 0x8, scoped, tag = 'scoped memory for tpu_custom_call.1']
    #allocation5 [shape = 'u8[8192]{0}', space=vmem, size = 0x2000, scoped, tag = 'input window, operand 1']
    #allocation6 [shape = 's32[2]{0}', space=sflag, size = 0x8, scoped, tag = 'scoped memory for tpu_custom_call.1']
    #allocation7 [shape = 'u8[8192]{0}', space=vmem, size = 0x2000, scoped, tag = 'input window, operand 2, single buffered']
    #allocation8 [shape = 'u8[8192]{0}', space=vmem, size = 0x2000, scoped, tag = 'output window, operand 0']
    %9 = vsyncpa [#allocation3], 0
    %s10 = scalar_lea.sflag [#allocation3], 1
    %11 = vsyncpa %s10, 0
    %12 = vsyncpa [#allocation6], 0
    %s13 = scalar_lea.sflag [#allocation6], 1
    %14 = vsyncpa %s13, 0
    %15 = vsyncpa [#allocation4], 0
    %s16 = scalar_lea.sflag [#allocation4], 1
    %17 = vsyncpa %s16, 0
    loop: start=0, step=1, limit=6
    $region2: #{tpu_custom_call.1} parent=1 // loop_pre_header
      _
    $region3: #{tpu_custom_call.1} parent=1 // loop_header
      %s19 = sphi 0, %s23
      %p20 = scmp.ge.s32.totalorder %s19, 6
      %s29 = sphi 0, %s31
      %s32 = sphi 0, %s29
      %s33 = sphi 0, %s32
      %s49 = sphi 0, %s33
      %s55 = sphi 0, %s57
      %s58 = sphi 0, %s55
      %s59 = sphi 0, %s58
      %s75 = sphi 0, %s59
      %s79 = sphi 0, %s79
      %s81 = sphi 0, %s79
      %s82 = sphi 0, %s81
      %s96 = sphi 0, %s82
      %s100 = sphi 0, %s100
      %s102 = sphi 0, %s100
      %s103 = sphi 0, %s102
      %s117 = sphi 0, %s103
      %s123 = sphi 0, %s125
      %s126 = sphi 0, %s123
      %s127 = sphi 0, %s126
      %s143 = sphi 0, %s127
    $region4: #{tpu_custom_call.1} parent=1 // loop_header_branch
      %22 = sbr.rel (%p20) target = $region8
    $region5: #{tpu_custom_call.1} parent=1 // loop_body
      %s24 = ssub.s32 %s19, 1
      %s25 = ssub.s32 %s19, 2
      %s26 = sadd.s32 %s19, 1
      %s27 = ssub.s32 %s19, %s26
      %p28 = scmp.eq.s32.totalorder %s27, 0
      %s30 = sadd.s32 %s29, 1
      %s31 = scalar_select %p28, %s29, %s30
      %p34 = pneg %p28
      %p35 = scmp.eq.s32.totalorder %s19, 3
      %p36 = por %p34, %p35
      %p37 = scmp.ne.s32.totalorder %s29, %s32
      %p38 = scmp.eq.s32.totalorder %s19, 0
      %p39 = por %p37, %p38
      %p40 = scmp.ne.s32.totalorder %s29, %s32
      %p41 = scmp.eq.s32.totalorder %s24, 3
      %p42 = por %p40, %p41
      %p43 = scmp.ne.s32.totalorder %s32, %s33
      %p44 = scmp.eq.s32.totalorder %s24, 0
      %p45 = por %p43, %p44
      %p46 = scmp.ne.s32.totalorder %s32, %s33
      %p47 = scmp.eq.s32.totalorder %s25, 3
      %p48 = por %p46, %p47
      %p50 = scmp.ne.s32.totalorder %s33, %s49
      %p51 = scmp.eq.s32.totalorder %s25, 0
      %p52 = por %p50, %p51
      %s53 = ssub.s32 %s19, %s26
      %p54 = scmp.eq.s32.totalorder %s53, 0
      %s56 = sadd.s32 %s55, 1
      %s57 = scalar_select %p54, %s55, %s56
      %p60 = pneg %p54
      %p61 = scmp.eq.s32.totalorder %s19, 3
      %p62 = por %p60, %p61
      %p63 = scmp.ne.s32.totalorder %s55, %s58
      %p64 = scmp.eq.s32.totalorder %s19, 0
      %p65 = por %p63, %p64
      %p66 = scmp.ne.s32.totalorder %s55, %s58
      %p67 = scmp.eq.s32.totalorder %s24, 3
      %p68 = por %p66, %p67
      %p69 = scmp.ne.s32.totalorder %s58, %s59
      %p70 = scmp.eq.s32.totalorder %s24, 0
      %p71 = por %p69, %p70
      %p72 = scmp.ne.s32.totalorder %s58, %s59
      %p73 = scmp.eq.s32.totalorder %s25, 3
      %p74 = por %p72, %p73
      %p76 = scmp.ne.s32.totalorder %s59, %s75
      %p77 = scmp.eq.s32.totalorder %s25, 0
      %p78 = por %p76, %p77
      %s80 = sadd.s32 %s79, 1
      %p83 = scmp.eq.s32.totalorder %s19, 3
      %p84 = scmp.ne.s32.totalorder %s79, %s81
      %p85 = scmp.eq.s32.totalorder %s19, 0
      %p86 = por %p84, %p85
      %p87 = scmp.ne.s32.totalorder %s79, %s81
      %p88 = scmp.eq.s32.totalorder %s24, 3
      %p89 = por %p87, %p88
      %p90 = scmp.ne.s32.totalorder %s81, %s82
      %p91 = scmp.eq.s32.totalorder %s24, 0
      %p92 = por %p90, %p91
      %p93 = scmp.ne.s32.totalorder %s81, %s82
      %p94 = scmp.eq.s32.totalorder %s25, 3
      %p95 = por %p93, %p94
      %p97 = scmp.ne.s32.totalorder %s82, %s96
      %p98 = scmp.eq.s32.totalorder %s25, 0
      %p99 = por %p97, %p98
      %s101 = sadd.s32 %s100, 1
      %p104 = scmp.eq.s32.totalorder %s19, 3
      %p105 = scmp.ne.s32.totalorder %s100, %s102
      %p106 = scmp.eq.s32.totalorder %s19, 0
      %p107 = por %p105, %p106
      %p108 = scmp.ne.s32.totalorder %s100, %s102
      %p109 = scmp.eq.s32.totalorder %s24, 3
      %p110 = por %p108, %p109
      %p111 = scmp.ne.s32.totalorder %s102, %s103
      %p112 = scmp.eq.s32.totalorder %s24, 0
      %p113 = por %p111, %p112
      %p114 = scmp.ne.s32.totalorder %s102, %s103
      %p115 = scmp.eq.s32.totalorder %s25, 3
      %p116 = por %p114, %p115
      %p118 = scmp.ne.s32.totalorder %s103, %s117
      %p119 = scmp.eq.s32.totalorder %s25, 0
      %p120 = por %p118, %p119
      %s121 = ssub.s32 %s19, %s26
      %p122 = scmp.eq.s32.totalorder %s121, 0
      %s124 = sadd.s32 %s123, 1
      %s125 = scalar_select %p122, %s123, %s124
      %p128 = pneg %p122
      %p129 = scmp.eq.s32.totalorder %s19, 3
      %p130 = por %p128, %p129
      %p131 = scmp.ne.s32.totalorder %s123, %s126
      %p132 = scmp.eq.s32.totalorder %s19, 0
      %p133 = por %p131, %p132
      %p134 = scmp.ne.s32.totalorder %s123, %s126
      %p135 = scmp.eq.s32.totalorder %s24, 3
      %p136 = por %p134, %p135
      %p137 = scmp.ne.s32.totalorder %s126, %s127
      %p138 = scmp.eq.s32.totalorder %s24, 0
      %p139 = por %p137, %p138
      %p140 = scmp.ne.s32.totalorder %s126, %s127
      %p141 = scmp.eq.s32.totalorder %s25, 3
      %p142 = por %p140, %p141
      %p144 = scmp.ne.s32.totalorder %s127, %s143
      %p145 = scmp.eq.s32.totalorder %s25, 0
      %p146 = por %p144, %p145
      %p147 = scmp.le.s32.totalorder 1, %s19
      %p148 = scmp.lt.s32.totalorder %s19, 5
      %p149 = pnand %p147, %p148
      %p150 = pneg %p149
      // Predicated region
      $region9: #{tpu_custom_call.1} parent=5 // pred_check
        _
      $region10: #{tpu_custom_call.1} parent=5 // pred_check_branch
        %152 = sbr.rel (%p149) target = $region12
      $region11: #{tpu_custom_call.1} parent=5 // pred_region
        %s153 = ssub.s32 %s19, 1
        // Predicated region
        $region13: #{tpu_custom_call.1} parent=11 // pred_check
          %p154 = pneg %p92
        $region14: #{tpu_custom_call.1} parent=11 // pred_check_branch
          %156 = sbr.rel (%p154) target = $region16
        $region15: #{tpu_custom_call.1} parent=11 // pred_region
          %s158 = ssub.s32 256, 256
          %159 = vsyncadd [#allocation6], %s158
          %s160 = sshll.u32 [#allocation7], 4
          %s161 = int_to_ptr.vmem [resolvable:$true] %s160
          %166 = dma.hbm_to_vmem [thread:$0]  %s2, 256, %s161, [#allocation6], 128, 128, 8
        $region16: #{tpu_custom_call.1} parent=11 // pred_fallthru
          _
        // Predicated region
        $region17: #{tpu_custom_call.1} parent=11 // pred_check
          %p167 = pneg %p113
        $region18: #{tpu_custom_call.1} parent=11 // pred_check_branch
          %169 = sbr.rel (%p167) target = $region20
        $region19: #{tpu_custom_call.1} parent=11 // pred_region
          _
        $region20: #{tpu_custom_call.1} parent=11 // pred_fallthru
          _
      $region12: #{tpu_custom_call.1} parent=5 // pred_fallthru
        _
      %p170 = scmp.lt.s32.totalorder %s19, 4
      // Predicated region
      $region21: #{tpu_custom_call.1} parent=5 // pred_check
        %p171 = pneg %p170
      $region22: #{tpu_custom_call.1} parent=5 // pred_check_branch
        %173 = sbr.rel (%p171) target = $region24
      $region23: #{tpu_custom_call.1} parent=5 // pred_region
        // Predicated region
        $region25: #{tpu_custom_call.1} parent=23 // pred_check
          %p174 = pneg %p39
        $region26: #{tpu_custom_call.1} parent=23 // pred_check_branch
          %176 = sbr.rel (%p174) target = $region28
        $region27: #{tpu_custom_call.1} parent=23 // pred_region
          %s177 = sand.u32 %s29, 1
          %s178 = scalar_lea.sflag [#allocation3], %s177
          %s179 = sand.u32 %s29, 1
          %s180 = smul.addr %s179, 8
          %s181 = scalar_lea.vmem [#allocation2], %s180
          %s183 = ssub.s32 128, 128
          %184 = vsyncadd %s178, %s183
          %s185 = smul.addr %s19, 128
          %s186 = scalar_lea.hbm %s0, %s185
          %s188 = sshll.u32 %s181, 4
          %s189 = int_to_ptr.vmem [resolvable:$true] %s188
          %191 = dma.hbm_to_vmem [thread:$0]  %s186, 128, %s189, %s178
        $region28: #{tpu_custom_call.1} parent=23 // pred_fallthru
          _
        // Predicated region
        $region29: #{tpu_custom_call.1} parent=23 // pred_check
          %p192 = pneg %p65
        $region30: #{tpu_custom_call.1} parent=23 // pred_check_branch
          %194 = sbr.rel (%p192) target = $region32
        $region31: #{tpu_custom_call.1} parent=23 // pred_region
          %s195 = sand.u32 %s19, 1
          %s196 = scalar_lea.sflag [#allocation6], %s195
          %s197 = sand.u32 %s55, 1
          %s198 = smul.addr %s197, 8
          %s199 = scalar_lea.vmem [#allocation5], %s198
          %s201 = ssub.s32 128, 128
          %202 = vsyncadd %s196, %s201
          %s203 = smul.addr %s19, 128
          %s204 = scalar_lea.hbm %s1, %s203
          %s206 = sshll.u32 %s199, 4
          %s207 = int_to_ptr.vmem [resolvable:$true] %s206
          %209 = dma.hbm_to_vmem [thread:$0]  %s204, 128, %s207, %s196
        $region32: #{tpu_custom_call.1} parent=23 // pred_fallthru
          _
      $region24: #{tpu_custom_call.1} parent=5 // pred_fallthru
        _
      %p210 = scmp.le.s32.totalorder 1, %s19
      %p211 = scmp.lt.s32.totalorder %s19, 5
      %p212 = pnand %p210, %p211
      %p213 = pneg %p212
      // Predicated region
      $region33: #{tpu_custom_call.1} parent=5 // pred_check
        _
      $region34: #{tpu_custom_call.1} parent=5 // pred_check_branch
        %215 = sbr.rel (%p212) target = $region36
      $region35: #{tpu_custom_call.1} parent=5 // pred_region
        %s216 = ssub.s32 %s19, 1
        %s217 = sand.u32 %s32, 1
        %s218 = scalar_lea.sflag [#allocation3], %s217
        %s219 = sand.u32 %s32, 1
        %s220 = smul.addr %s219, 8
        %s221 = scalar_lea.vmem [#allocation2], %s220
        // Predicated region
        $region37: #{tpu_custom_call.1} parent=35 // pred_check
          %p222 = pneg %p45
        $region38: #{tpu_custom_call.1} parent=35 // pred_check_branch
          %224 = sbr.rel (%p222) target = $region40
        $region39: #{tpu_custom_call.1} parent=35 // pred_region
          %225 = dma.done %s218, 128
        $region40: #{tpu_custom_call.1} parent=35 // pred_fallthru
          _
        %s226 = sand.u32 %s24, 1
        %s227 = scalar_lea.sflag [#allocation6], %s226
        %s228 = sand.u32 %s58, 1
        %s229 = smul.addr %s228, 8
        %s230 = scalar_lea.vmem [#allocation5], %s229
        // Predicated region
        $region41: #{tpu_custom_call.1} parent=35 // pred_check
          %p231 = pneg %p71
        $region42: #{tpu_custom_call.1} parent=35 // pred_check_branch
          %233 = sbr.rel (%p231) target = $region44
        $region43: #{tpu_custom_call.1} parent=35 // pred_region
          %234 = dma.done %s227, 128
        $region44: #{tpu_custom_call.1} parent=35 // pred_fallthru
          _
        // Predicated region
        $region45: #{tpu_custom_call.1} parent=35 // pred_check
          %p235 = pneg %p92
        $region46: #{tpu_custom_call.1} parent=35 // pred_check_branch
          %237 = sbr.rel (%p235) target = $region48
        $region47: #{tpu_custom_call.1} parent=35 // pred_region
          %238 = dma.done [#allocation6], 256
        $region48: #{tpu_custom_call.1} parent=35 // pred_fallthru
          _
        %s239 = sand.u32 %s32, 1
        %s240 = scalar_lea.sflag [#allocation3], %s239
        %s241 = sand.u32 %s32, 1
        %s242 = smul.addr %s241, 8
        %s243 = scalar_lea.vmem [#allocation2], %s242
        %p244 = pneg %p45
        %p245 = pneg %p42
        %s246 = sand.u32 %s24, 1
        %s247 = scalar_lea.sflag [#allocation6], %s246
        %s248 = sand.u32 %s58, 1
        %s249 = smul.addr %s248, 8
        %s250 = scalar_lea.vmem [#allocation5], %s249
        %p251 = pneg %p71
        %p252 = pneg %p68
        %p253 = pneg %p92
        %p254 = pneg %p89
        %p255 = pneg %p113
        %p256 = pneg %p110
        %p257 = pneg %p139
        %p258 = pneg %p136
        %s259 = sand.u32 %s126, 1
        %s260 = scalar_lea.sflag [#allocation4], %s259
        %s261 = sand.u32 %s126, 1
        %s262 = smul.addr %s261, 8
        %s263 = scalar_lea.vmem [#allocation8], %s262
        %v264 = vld [vmem:[%s221] sm:$0xff]
        %v265 = vlaneseq
        %v266 = vshrl.u32 %v265, 7
        %v267 = vlaneseq
        %v268 = vand.u32 %v267, 127
        %vm269 = vcmp.eq.s32.totalorder %v266, %v268
        %vm270 = vcmp.ne.f32.partialorder %v264, 0.0
        %vm271 = vmor %vm270, %vm269
        %v272 = vsel %vm271, 1, 0
        %v273 = vcvt.s32.f32 %v272
        %vm274 = vcmask 64512
        %v275 = vsel %vm274, %v273, 0.0
        %276 = vadd.xlane.f32.xlu0 %v275
        %v277 = vpop.xlane.xlu0 %276
        %v278 = vrsqrt.pop %v277
        %v279 = vld [vmem:[%s230] sm:$0xff]
        %v280 = vld [vmem:[#allocation7] sm:$0xff]
        %v281 = vld [vmem:[#allocation7 + $0x8] sm:$0xff]
        %vm282 = vcmask 130048
        %v284 = vsel %vm282, %v279, 0
        %286 = vmatprep.subr.mxu0 0.0
        %287 = vmatpush1.msra.mxu0 %v280
        %288 = vmatprep.subr.mxu0 0.0
        %289 = vmatpush1.msra.mxu0 %v281
        %290 = vmatprep.subr.mxu0 0.0
        %291 = vmatpush1.msra.mxu0 0.0
        %292 = vmatprep.subr.mxu0 0.0
        %293 = vmatpush1.msra.mxu0 0.0
        %294 = vmatprep.subr.mxu0 0.0
        %295 = vmatpush1.msra.mxu0 0.0
        %296 = vmatprep.subr.mxu0 0.0
        %297 = vmatpush1.msra.mxu0 0.0
        %298 = vmatprep.subr.mxu0 0.0
        %299 = vmatpush1.msra.mxu0 0.0
        %300 = vmatprep.subr.mxu0 0.0
        %301 = vmatpush1.msra.mxu0 0.0
        %302 = vmatprep.subr.mxu0 0.0
        %303 = vmatpush1.msra.mxu0 0.0
        %304 = vmatprep.subr.mxu0 0.0
        %305 = vmatpush1.msra.mxu0 0.0
        %306 = vmatprep.subr.mxu0 0.0
        %307 = vmatpush1.msra.mxu0 0.0
        %308 = vmatprep.subr.mxu0 0.0
        %309 = vmatpush1.msra.mxu0 0.0
        %310 = vmatprep.subr.mxu0 0.0
        %311 = vmatpush1.msra.mxu0 0.0
        %312 = vmatprep.subr.mxu0 0.0
        %313 = vmatpush1.msra.mxu0 0.0
        %314 = vmatprep.subr.mxu0 0.0
        %315 = vmatpush1.msra.mxu0 0.0
        %316 = vmatprep.subr.mxu0 0.0
        %317 = vmatpush1.msra.mxu0 0.0
        %318 = vmatprep.subr.mxu0 0.0
        %319 = vmatpush1.msra.mxu0 0.0
        %320 = vmatprep.subr.mxu0 0.0
        %321 = vmatpush1.msra.mxu0 0.0
        %322 = vmatprep.subr.mxu0 0.0
        %323 = vmatpush1.msra.mxu0 0.0
        %324 = vmatprep.subr.mxu0 0.0
        %325 = vmatpush1.msra.mxu0 0.0
        %326 = vmatprep.subr.mxu0 0.0
        %327 = vmatpush1.msra.mxu0 0.0
        %328 = vmatprep.subr.mxu0 0.0
        %329 = vmatpush1.msra.mxu0 0.0
        %330 = vmatprep.subr.mxu0 0.0
        %331 = vmatpush1.msra.mxu0 0.0
        %332 = vmatprep.subr.mxu0 0.0
        %333 = vmatpush1.msra.mxu0 0.0
        %334 = vmatprep.subr.mxu0 0.0
        %335 = vmatpush1.msra.mxu0 0.0
        %336 = vmatprep.subr.mxu0 0.0
        %337 = vmatpush1.msra.mxu0 0.0
        %338 = vmatprep.subr.mxu0 0.0
        %339 = vmatpush1.msra.mxu0 0.0
        %340 = vmatprep.subr.mxu0 0.0
        %341 = vmatpush1.msra.mxu0 0.0
        %342 = vmatprep.subr.mxu0 0.0
        %343 = vmatpush1.msra.mxu0 0.0
        %344 = vmatprep.subr.mxu0 0.0
        %345 = vmatpush1.msra.mxu0 0.0
        %346 = vmatprep.subr.mxu0 0.0
        %347 = vmatpush1.msra.mxu0 0.0
        %348 = vmatprep.subr.mxu0 0.0
        %349 = vmatpush1.msra.mxu0 0.0
        %350 = vmatprep.mubr.f32.mxu0 0.0
        %351 = vmatmul.mubr.f32.gmra.mrb[0].mxu0 %v284
        %v352 = vpop.f32.mrb[0].mxu0
        %v353 = vadd.f32 0.0, %v352
        %v354 = vpop.f32.mrb[0].mxu0
        %355 = vdwg.mxu0
        %v356 = vmul.f32 %v278, %v353
        %v358 = vsel %vm274, %v273, 0
        %360 = vmatprep.subr.mxu0 0.0
        %361 = vmatpush1.msra.mxu0 %v356
        %362 = vmatprep.subr.mxu0 0.0
        %363 = vmatpush1.msra.mxu0 0.0
        %364 = vmatprep.subr.mxu0 0.0
        %365 = vmatpush1.msra.mxu0 0.0
        %366 = vmatprep.subr.mxu0 0.0
        %367 = vmatpush1.msra.mxu0 0.0
        %368 = vmatprep.subr.mxu0 0.0
        %369 = vmatpush1.msra.mxu0 0.0
        %370 = vmatprep.subr.mxu0 0.0
        %371 = vmatpush1.msra.mxu0 0.0
        %372 = vmatprep.subr.mxu0 0.0
        %373 = vmatpush1.msra.mxu0 0.0
        %374 = vmatprep.subr.mxu0 0.0
        %375 = vmatpush1.msra.mxu0 0.0
        %376 = vmatprep.subr.mxu0 0.0
        %377 = vmatpush1.msra.mxu0 0.0
        %378 = vmatprep.subr.mxu0 0.0
        %379 = vmatpush1.msra.mxu0 0.0
        %380 = vmatprep.subr.mxu0 0.0
        %381 = vmatpush1.msra.mxu0 0.0
        %382 = vmatprep.subr.mxu0 0.0
        %383 = vmatpush1.msra.mxu0 0.0
        %384 = vmatprep.subr.mxu0 0.0
        %385 = vmatpush1.msra.mxu0 0.0
        %386 = vmatprep.subr.mxu0 0.0
        %387 = vmatpush1.msra.mxu0 0.0
        %388 = vmatprep.subr.mxu0 0.0
        %389 = vmatpush1.msra.mxu0 0.0
        %390 = vmatprep.subr.mxu0 0.0
        %391 = vmatpush1.msra.mxu0 0.0
        %392 = vmatprep.subr.mxu0 0.0
        %393 = vmatpush1.msra.mxu0 0.0
        %394 = vmatprep.subr.mxu0 0.0
        %395 = vmatpush1.msra.mxu0 0.0
        %396 = vmatprep.subr.mxu0 0.0
        %397 = vmatpush1.msra.mxu0 0.0
        %398 = vmatprep.subr.mxu0 0.0
        %399 = vmatpush1.msra.mxu0 0.0
        %400 = vmatprep.subr.mxu0 0.0
        %401 = vmatpush1.msra.mxu0 0.0
        %402 = vmatprep.subr.mxu0 0.0
        %403 = vmatpush1.msra.mxu0 0.0
        %404 = vmatprep.subr.mxu0 0.0
        %405 = vmatpush1.msra.mxu0 0.0
        %406 = vmatprep.subr.mxu0 0.0
        %407 = vmatpush1.msra.mxu0 0.0
        %408 = vmatprep.subr.mxu0 0.0
        %409 = vmatpush1.msra.mxu0 0.0
        %410 = vmatprep.subr.mxu0 0.0
        %411 = vmatpush1.msra.mxu0 0.0
        %412 = vmatprep.subr.mxu0 0.0
        %413 = vmatpush1.msra.mxu0 0.0
        %414 = vmatprep.subr.mxu0 0.0
        %415 = vmatpush1.msra.mxu0 0.0
        %416 = vmatprep.subr.mxu0 0.0
        %417 = vmatpush1.msra.mxu0 0.0
        %418 = vmatprep.subr.mxu0 0.0
        %419 = vmatpush1.msra.mxu0 0.0
        %420 = vmatprep.subr.mxu0 0.0
        %421 = vmatpush1.msra.mxu0 0.0
        %422 = vmatprep.subr.mxu0 0.0
        %423 = vmatpush1.msra.mxu0 0.0
        %424 = vmatprep.mubr.f32.mxu0 0.0
        %425 = vmatmul.mubr.f32.gmra.mrb[0].mxu0 %v358
        %v426 = vpop.f32.mrb[0].mxu0
        %v427 = vadd.f32 0.0, %v426
        %v428 = vpop.f32.mrb[0].mxu0
        %429 = vdwg.mxu0
        %v430 = vmul.f32 %v278, %v427
        %v431 = vld [vmem:[%s3] sm:$0x1]
        %v433 = vlaneseq
        %v434 = vshrl.u32 %v433, 7
        %v435 = vsub.s32 0, %v434
        %v436 = vrot.slane %v431, %v435
        %v438 = vadd.f32 %v430, %v436
        %v439 = vmax.f32 %v438, 0.0
        %440 = vst [vmem:[%s263] sm:$0xff] %v439
        %s441 = sand.u32 %s126, 1
        %s442 = scalar_lea.sflag [#allocation4], %s441
        %s443 = sand.u32 %s126, 1
        %s444 = smul.addr %s443, 8
        %s445 = scalar_lea.vmem [#allocation8], %s444
        // Predicated region
        $region49: #{tpu_custom_call.1} parent=35 // pred_check
          %p446 = pneg %p136
        $region50: #{tpu_custom_call.1} parent=35 // pred_check_branch
          %448 = sbr.rel (%p446) target = $region52
        $region51: #{tpu_custom_call.1} parent=35 // pred_region
          %s450 = ssub.s32 128, 128
          %451 = vsyncadd %s442, %s450
          %s452 = smul.addr %s24, 128
          %s453 = scalar_lea.hbm %s4, %s452
          %s455 = sshll.u32 %s445, 4
          %s456 = int_to_ptr.vmem [resolvable:$true] %s455
          %458 = dma.vmem_to_hbm [thread:$0]  %s456, 128, %s453, %s442
        $region52: #{tpu_custom_call.1} parent=35 // pred_fallthru
          _
      $region36: #{tpu_custom_call.1} parent=5 // pred_fallthru
        _
      %p459 = scmp.le.s32.totalorder 2, %s19
      // Predicated region
      $region53: #{tpu_custom_call.1} parent=5 // pred_check
        %p460 = pneg %p459
      $region54: #{tpu_custom_call.1} parent=5 // pred_check_branch
        %462 = sbr.rel (%p460) target = $region56
      $region55: #{tpu_custom_call.1} parent=5 // pred_region
        %s463 = ssub.s32 %s19, 2
        // Predicated region
        $region57: #{tpu_custom_call.1} parent=55 // pred_check
          %p464 = pneg %p142
        $region58: #{tpu_custom_call.1} parent=55 // pred_check_branch
          %466 = sbr.rel (%p464) target = $region60
        $region59: #{tpu_custom_call.1} parent=55 // pred_region
          %s467 = sand.u32 %s127, 1
          %s468 = scalar_lea.sflag [#allocation4], %s467
          %s469 = sand.u32 %s127, 1
          %s470 = smul.addr %s469, 8
          %s471 = scalar_lea.vmem [#allocation8], %s470
          %472 = dma.done %s468, 128
        $region60: #{tpu_custom_call.1} parent=55 // pred_fallthru
          _
      $region56: #{tpu_custom_call.1} parent=5 // pred_fallthru
        _
    $region6: #{tpu_custom_call.1} parent=1 // loop_footer
      %s23 = sadd.s32 1, %s19
    $region7: #{tpu_custom_call.1} parent=1 // loop_footer_branch
      %18 = sbr.rel target = $region3
    $region8: #{tpu_custom_call.1} parent=1 // loop_exit
      _
    %473 = vsyncpa [#allocation3], 1
    %s474 = scalar_lea.sflag [#allocation3], 1
    %475 = vsyncpa %s474, 1
    %476 = vsyncpa [#allocation6], 1
    %s477 = scalar_lea.sflag [#allocation6], 1
    %478 = vsyncpa %s477, 1
    %479 = vsyncpa [#allocation4], 1
    %s480 = scalar_lea.sflag [#allocation4], 1
    %481 = vsyncpa %s480, 1

</llo_original>
